<compile_context>
chip_gen: v5e
topology: v5e:2x2
jax: 0.10.0
libtpu: 0.0.40
codegen_flags: <defaults>
</compile_context>

<pallas_src>
import jax
import jax.numpy as jnp
from jax.experimental import pallas as pl
from jax.experimental.pallas import tpu as pltpu

LN_EPS = 1e-5  # PyTorch nn.LayerNorm default
_MIB = 1024 * 1024


def _layernorm(x, gamma, beta):
    mean = jnp.mean(x, axis=-1, keepdims=True)
    xc = x - mean
    var = jnp.mean(xc * xc, axis=-1, keepdims=True)
    return xc * jax.lax.rsqrt(var + LN_EPS) * gamma + beta


# ----------------------------- kernel body ---------------------------------


def _ffn_compute(tgt_ref, tgt_in_ref, w1_ref, b1_ref, w2_ref, b2_ref,
                 g2_ref, be2_ref, g3_ref, be3_ref, out_ref,
                 x_f32, x_mm, acc, precision):
    k = pl.program_id(1)

    @pl.when(k == 0)
    def _():
        # residual add (dropout2 identity) + norm2, once per row tile
        x = tgt_ref[...].astype(jnp.float32) + tgt_in_ref[...].astype(jnp.float32)
        x = _layernorm(x,
                       g2_ref[...].astype(jnp.float32),
                       be2_ref[...].astype(jnp.float32))
        x_f32[...] = x
        if x_mm is not None:
            x_mm[...] = x.astype(x_mm.dtype)   # cast once for bf16 matmuls
        acc[...] = jnp.zeros_like(acc)

    xin = x_mm[...] if x_mm is not None else x_f32[...]
    h = jnp.dot(xin, w1_ref[...],
                preferred_element_type=jnp.float32, precision=precision)
    h = jnp.maximum(h + b1_ref[...].astype(jnp.float32), 0.0)
    acc[...] += jnp.dot(h.astype(w2_ref.dtype), w2_ref[...],
                        preferred_element_type=jnp.float32, precision=precision)

    @pl.when(k == pl.num_programs(1) - 1)
    def _():
        y = acc[...] + b2_ref[...].astype(jnp.float32)
        z = x_f32[...] + y                      # residual (dropout3 identity)
        out_ref[...] = _layernorm(
            z,
            g3_ref[...].astype(jnp.float32),
            be3_ref[...].astype(jnp.float32)).astype(out_ref.dtype)


def _make_kernel(use_x_mm, precision):
    if use_x_mm:
        def kernel(tgt_ref, tgt_in_ref, w1_ref, b1_ref, w2_ref, b2_ref,
                   g2_ref, be2_ref, g3_ref, be3_ref, out_ref,
                   x_f32, x_mm, acc):
            _ffn_compute(tgt_ref, tgt_in_ref, w1_ref, b1_ref, w2_ref, b2_ref,
                         g2_ref, be2_ref, g3_ref, be3_ref, out_ref,
                         x_f32, x_mm, acc, precision)
    else:
        def kernel(tgt_ref, tgt_in_ref, w1_ref, b1_ref, w2_ref, b2_ref,
                   g2_ref, be2_ref, g3_ref, be3_ref, out_ref,
                   x_f32, acc):
            _ffn_compute(tgt_ref, tgt_in_ref, w1_ref, b1_ref, w2_ref, b2_ref,
                         g2_ref, be2_ref, g3_ref, be3_ref, out_ref,
                         x_f32, None, acc, precision)
    return kernel


# --------------------------- tile selection ---------------------------------


def _round_up(x, m):
    return (x + m - 1) // m * m


def _tpu_generation():
    """Generation-aware VMEM budget / tile targets (safe fallbacks)."""
    try:
        kind = jax.devices()[0].device_kind.lower()
    except Exception:
        kind = ""
    vmem_phys = None
    try:
        vmem_phys = int(pltpu.get_tpu_info().vmem_capacity_bytes)
    except Exception:
        vmem_phys = None

    if "v7" in kind:
        phys = vmem_phys or 64 * _MIB
        # 64 MiB physical: leave headroom for compiler scratch / semaphores.
        return dict(vmem_budget=min(int(phys * 0.85), 56 * _MIB),
                    tile_m=512, tile_ff=1024, two_cores=True)
    if "v6" in kind:
        phys = vmem_phys or 128 * _MIB
        return dict(vmem_budget=min(int(phys * 0.85), 110 * _MIB),
                    tile_m=1024, tile_ff=1024, two_cores=False)
    if "v5" in kind:
        phys = vmem_phys or 128 * _MIB
        return dict(vmem_budget=min(int(phys * 0.85), 104 * _MIB),
                    tile_m=512, tile_ff=1024, two_cores=False)
    # Unknown chip: use the most conservative (v7x-like) budget.
    phys = vmem_phys or 64 * _MIB
    return dict(vmem_budget=min(int(phys * 0.85), 56 * _MIB),
                tile_m=512, tile_ff=1024, two_cores=True)


def _vmem_footprint(tm, tff, d_model, io_bytes, mm_bytes, use_x_mm):
    rows = 3 * 2 * tm * d_model * io_bytes            # tgt/tgt_input/out, 2 bufs
    weights = 2 * 2 * d_model * tff * mm_bytes        # W1 blk + W2 blk, 2 bufs
    vecs = 2 * (tff + 5 * d_model) * 4                # b1/b2/gammas/betas
    scratch = 2 * tm * d_model * 4                    # x_f32 + acc
    if use_x_mm:
        scratch += tm * d_model * mm_bytes            # matmul-dtype copy of LN2(x)
    h = tm * tff * 4                                  # relu intermediate (f32)
    return rows + weights + vecs + scratch + h


def _largest_ff_block(d_ff, target):
    """Largest divisor of d_ff that is a multiple of 128 and <= target."""
    if target >= d_ff:
        return d_ff
    best = None
    cand = 128
    while cand <= target:
        if d_ff % cand == 0:
            best = cand
        cand += 128
    if best is not None:
        return best
    # TODO(synk): pad d_ff instead of falling back to a full-width block for
    # awkward d_ff that have no 128-multiple divisor below the target.
    return d_ff


def _choose_tiles(M, d_model, d_ff, io_bytes, mm_bytes, use_x_mm, gen,
                  tile_m, tile_ff, allow_resident):
    m8 = _round_up(max(M, 1), 8)
    tm = tile_m if tile_m is not None else gen["tile_m"]
    tm = max(8, min(_round_up(int(tm), 8), m8))

    # v7x megacore: ensure >= 2 row tiles so both TensorCores get work.
    if gen["two_cores"] and m8 > 8 and m8 <= tm:
        tm = max(8, _round_up((M + 1) // 2, 8))

    budget = gen["vmem_budget"]

    # --- Option A: weights fully VMEM-resident (DMA'd once for the grid) ----
    if allow_resident:
        tm_floor = max(8, min(tm, 256))   # don't shrink rows too far for this
        tm_a = tm
        while tm_a >= tm_floor:
            if _vmem_footprint(tm_a, d_ff, d_model, io_bytes, mm_bytes,
                               use_x_mm) <= budget:
                return tm_a, d_ff, True
            nxt = max(8, _round_up(tm_a // 2, 8))
            if nxt == tm_a:
                break
            tm_a = nxt

    # --- Option B: stream d_ff in blocks (reduction grid axis) --------------
    target_ff = tile_ff if tile_ff is not None else gen["tile_ff"]
    tff = _largest_ff_block(d_ff, int(target_ff))
    while True:
        if _vmem_footprint(tm, tff, d_model, io_bytes, mm_bytes,
                           use_x_mm) <= budget:
            return tm, tff, False
        smaller = _largest_ff_block(d_ff, tff - 128) if tff > 128 else None
        if smaller is not None and smaller < tff:
            tff = smaller
            continue
        if tm > 8:
            tm = max(8, _round_up(tm // 2, 8))
            continue
        return tm, tff, False   # best effort; let the compiler decide


# ------------------------------- wrapper ------------------------------------


def ffn_forward(tgt, tgt_input, params, *, tile_m=None, tile_ff=None,
                matmul_dtype=jnp.bfloat16, allow_weight_residency=True,
                weight_buffers=None):
    """tgt, tgt_input: (..., d_model).  Whole FFN fused in one Pallas kernel."""
    orig_shape = tgt.shape
    d_model = orig_shape[-1]
    x = tgt.reshape(-1, d_model)
    xi = tgt_input.reshape(-1, d_model)
    M = x.shape[0]

    w1, b1, w2, b2, g2, be2, g3, be3 = params
    d_ff = w1.shape[1]

    mm_dtype = jnp.dtype(matmul_dtype)
    use_x_mm = mm_dtype != jnp.dtype(jnp.float32)
    io_bytes = jnp.dtype(x.dtype).itemsize
    mm_bytes = mm_dtype.itemsize

    gen = _tpu_generation()
    tm, tff, resident = _choose_tiles(M, d_model, d_ff, io_bytes, mm_bytes,
                                      use_x_mm, gen, tile_m, tile_ff,
                                      allow_weight_residency)
    n_k = d_ff // tff
    Mp = _round_up(M, tm)
    if Mp != M:
        pad = Mp - M
        x = jnp.pad(x, ((0, pad), (0, 0)))
        xi = jnp.pad(xi, ((0, pad), (0, 0)))

    # matmul operands in matmul_dtype (bf16 halves weight DMA + VMEM);
    # f32 accumulation requested inside the kernel.
    w1 = w1.astype(mm_dtype)
    w2 = w2.astype(mm_dtype)

    footprint = _vmem_footprint(tm, tff, d_model, io_bytes, mm_bytes, use_x_mm)
    vmem_limit = int(min(gen["vmem_budget"],
                         max(32 * _MIB, int(footprint * 1.3))))

    precision = jax.lax.Precision.HIGHEST if not use_x_mm else None
    kernel = _make_kernel(use_x_mm, precision)

    row_spec = pl.BlockSpec((tm, d_model), lambda i, k: (i, 0))
    const_vec = pl.BlockSpec((1, d_model), lambda i, k: (0, 0))

    # Optional deeper prefetch for streamed weights (knob; default = 2 bufs).
    w_kwargs = {}
    if weight_buffers is not None and not resident:
        w_kwargs = dict(pipeline_mode=pl.Buffered(int(weight_buffers)))
    w1_spec = pl.BlockSpec((d_model, tff), lambda i, k: (0, k), **w_kwargs)
    w2_spec = pl.BlockSpec((tff, d_model), lambda i, k: (k, 0), **w_kwargs)

    scratch = [pltpu.VMEM((tm, d_model), jnp.float32)]        # x_f32 (LN2 out)
    if use_x_mm:
        scratch.append(pltpu.VMEM((tm, d_model), mm_dtype))   # x in matmul dtype
    scratch.append(pltpu.VMEM((tm, d_model), jnp.float32))    # y accumulator

    out = pl.pallas_call(
        kernel,
        out_shape=jax.ShapeDtypeStruct((Mp, d_model), tgt.dtype),
        grid_spec=pltpu.PrefetchScalarGridSpec(
            num_scalar_prefetch=0,
            grid=(Mp // tm, n_k),
            in_specs=[
                row_spec,                                      # tgt
                row_spec,                                      # tgt_input
                w1_spec,                                       # W1 (in, out)
                pl.BlockSpec((1, tff), lambda i, k: (0, k)),   # b1
                w2_spec,                                       # W2 (in, out)
                const_vec,                                     # b2
                const_vec,                                     # norm2 gamma
                const_vec,                                     # norm2 beta
                const_vec,                                     # norm3 gamma
                const_vec,                                     # norm3 beta
            ],
            out_specs=row_spec,
            scratch_shapes=scratch,
        ),
        compiler_params=pltpu.CompilerParams(
            dimension_semantics=("parallel", "arbitrary"),
            vmem_limit_bytes=vmem_limit,
        ),
    )(x, xi, w1, b1, w2, b2, g2, be2, g3, be3)

    return out[:M].reshape(orig_shape)


# ------------------------------ reference -----------------------------------


def init_params(key, d_model, d_ff, dtype=jnp.float32):
    k1, k2, k3, k4 = jax.random.split(key, 4)
    lim1 = 1.0 / (d_model ** 0.5)
    lim2 = 1.0 / (d_ff ** 0.5)
    w1 = jax.random.uniform(k1, (d_model, d_ff), dtype, -lim1, lim1)
    b1 = jax.random.uniform(k2, (1, d_ff), dtype, -lim1, lim1)
    w2 = jax.random.uniform(k3, (d_ff, d_model), dtype, -lim2, lim2)
    b2 = jax.random.uniform(k4, (1, d_model), dtype, -lim2, lim2)
    g2 = jnp.ones((1, d_model), dtype)
    be2 = jnp.zeros((1, d_model), dtype)
    g3 = jnp.ones((1, d_model), dtype)
    be3 = jnp.zeros((1, d_model), dtype)
    return (w1, b1, w2, b2, g2, be2, g3, be3)


def ffn_ref(tgt, tgt_input, params):
    w1, b1, w2, b2, g2, be2, g3, be3 = params
    x = tgt + tgt_input
    x = _layernorm(x, g2, be2)
    y = jnp.maximum(x @ w1 + b1, 0.0) @ w2 + b2
    x = x + y
    return _layernorm(x, g3, be3)


if __name__ == "__main__":
    key = jax.random.PRNGKey(0)
    k_t, k_ti, k_p = jax.random.split(key, 3)

    # --- Test 1: module-like small shapes (seq=8, batch=2, d_model=32, ff=64)
    seq, batch, d_model, d_ff = 8, 2, 32, 64
    tgt = jax.random.normal(k_t, (seq, batch, d_model), jnp.float32)
    tgt_input = jax.random.normal(k_ti, (seq, batch, d_model), jnp.float32)
    params = init_params(k_p, d_model, d_ff)
    ref = ffn_ref(tgt, tgt_input, params)

    out_f32 = jax.block_until_ready(
        ffn_forward(tgt, tgt_input, params, matmul_dtype=jnp.float32))
    assert out_f32.shape == tgt.shape and out_f32.dtype == tgt.dtype
    assert jnp.allclose(out_f32, ref, atol=1e-5, rtol=1e-5), "f32 mismatch"

    out_bf16 = jax.block_until_ready(
        ffn_forward(tgt, tgt_input, params, matmul_dtype=jnp.bfloat16))
    assert out_bf16.shape == tgt.shape and out_bf16.dtype == tgt.dtype
    assert jnp.allclose(out_bf16, ref, atol=5e-2, rtol=5e-2), "bf16 mismatch"

    # --- Test 2: exercises M padding (120 -> 128) and the streamed d_ff
    #     reduction axis (weight residency disabled to force n_k > 1).
    k2 = jax.random.PRNGKey(1)
    k_t2, k_ti2, k_p2 = jax.random.split(k2, 3)
    seq2, batch2, d_model2, d_ff2 = 40, 3, 128, 256
    tgt2 = jax.random.normal(k_t2, (seq2, batch2, d_model2), jnp.float32)
    tgt_input2 = jax.random.normal(k_ti2, (seq2, batch2, d_model2), jnp.float32)
    params2 = init_params(k_p2, d_model2, d_ff2)
    ref2 = ffn_ref(tgt2, tgt_input2, params2)
    out2 = jax.block_until_ready(
        ffn_forward(tgt2, tgt_input2, params2, tile_m=64, tile_ff=128,
                    matmul_dtype=jnp.float32, allow_weight_residency=False))
    assert jnp.allclose(out2, ref2, atol=1e-4, rtol=1e-4), "tiled mismatch"

    # --- Test 3: auto-tiled defaults (weight residency path, bf16 matmuls)
    out3 = jax.block_until_ready(
        ffn_forward(tgt2, tgt_input2, params2, matmul_dtype=jnp.bfloat16))
    assert jnp.allclose(out3, ref2, atol=5e-2, rtol=5e-2), "auto mismatch"

    print("KERNEL_OK")
</pallas_src>

<mosaic_0001>
module attributes {stable_mosaic.version = 11 : i64} {
  func.func @kernel(%arg0: i32, %arg1: i32, %arg2: memref<8x32xf32, #tpu.memory_space<vmem>>, %arg3: memref<8x32xf32, #tpu.memory_space<vmem>>, %arg4: memref<32x64xf32, #tpu.memory_space<vmem>>, %arg5: memref<1x64xf32, #tpu.memory_space<vmem>>, %arg6: memref<64x32xf32, #tpu.memory_space<vmem>>, %arg7: memref<1x32xf32, #tpu.memory_space<vmem>>, %arg8: memref<1x32xf32, #tpu.memory_space<vmem>>, %arg9: memref<1x32xf32, #tpu.memory_space<vmem>>, %arg10: memref<1x32xf32, #tpu.memory_space<vmem>>, %arg11: memref<1x32xf32, #tpu.memory_space<vmem>>, %arg12: memref<8x32xf32, #tpu.memory_space<vmem>>, %arg13: memref<8x32xf32, #tpu.memory_space<vmem>>, %arg14: memref<8x32xf32, #tpu.memory_space<vmem>>) attributes {dimension_semantics = [#tpu.dimension_semantics<parallel>, #tpu.dimension_semantics<arbitrary>], iteration_bounds = array<i64: 2, 1>, scalar_prefetch = 0 : i64, scratch_operands = 2 : i64, tpu.core_type = #tpu.core_type<tc>, window_params = [{transform_indices = @transform_0, window_bounds = array<i64: 8, 32>}, {transform_indices = @transform_1, window_bounds = array<i64: 8, 32>}, {transform_indices = @transform_2, window_bounds = array<i64: 32, 64>}, {transform_indices = @transform_3, window_bounds = array<i64: 1, 64>}, {transform_indices = @transform_4, window_bounds = array<i64: 64, 32>}, {pipeline_mode = #tpu.pipeline_mode<synchronous>, transform_indices = @transform_5, window_bounds = array<i64: 1, 32>}, {pipeline_mode = #tpu.pipeline_mode<synchronous>, transform_indices = @transform_6, window_bounds = array<i64: 1, 32>}, {pipeline_mode = #tpu.pipeline_mode<synchronous>, transform_indices = @transform_7, window_bounds = array<i64: 1, 32>}, {pipeline_mode = #tpu.pipeline_mode<synchronous>, transform_indices = @transform_8, window_bounds = array<i64: 1, 32>}, {pipeline_mode = #tpu.pipeline_mode<synchronous>, transform_indices = @transform_9, window_bounds = array<i64: 1, 32>}, {transform_indices = @transform_10, window_bounds = array<i64: 8, 32>}]} {
    %c0_i32 = arith.constant 0 : i32
    %0 = arith.cmpi eq, %arg1, %c0_i32 : i32
    %1 = arith.extui %0 : i1 to i32
    %c0_i32_0 = arith.constant 0 : i32
    %2 = arith.cmpi ne, %1, %c0_i32_0 : i32
    scf.if %2 {
      %c0_16 = arith.constant 0 : index
      %c0_17 = arith.constant 0 : index
      %19 = vector.load %arg2[%c0_16, %c0_17] : memref<8x32xf32, #tpu.memory_space<vmem>>, vector<8x32xf32>
      %c0_18 = arith.constant 0 : index
      %c0_19 = arith.constant 0 : index
      %20 = vector.load %arg3[%c0_18, %c0_19] : memref<8x32xf32, #tpu.memory_space<vmem>>, vector<8x32xf32>
      %21 = arith.addf %19, %20 : vector<8x32xf32>
      %c0_20 = arith.constant 0 : index
      %c0_21 = arith.constant 0 : index
      %22 = vector.load %arg8[%c0_20, %c0_21] : memref<1x32xf32, #tpu.memory_space<vmem>>, vector<1x32xf32>
      %c0_22 = arith.constant 0 : index
      %c0_23 = arith.constant 0 : index
      %23 = vector.load %arg9[%c0_22, %c0_23] : memref<1x32xf32, #tpu.memory_space<vmem>>, vector<1x32xf32>
      %cst_24 = arith.constant dense<0.000000e+00> : vector<8xf32>
      %24 = vector.multi_reduction <add>, %21, %cst_24 [1] : vector<8x32xf32> to vector<8xf32>
      %25 = vector.shape_cast %24 : vector<8xf32> to vector<8x1xf32>
      %cst_25 = arith.constant 3.200000e+01 : f32
      %26 = vector.broadcast %cst_25 : f32 to vector<8x1xf32>
      %27 = arith.divf %25, %26 : vector<8x1xf32>
      %28 = vector.broadcast %27 : vector<8x1xf32> to vector<8x32xf32>
      %29 = arith.subf %21, %28 : vector<8x32xf32>
      %30 = arith.mulf %29, %29 : vector<8x32xf32>
      %cst_26 = arith.constant dense<0.000000e+00> : vector<8xf32>
      %31 = vector.multi_reduction <add>, %30, %cst_26 [1] : vector<8x32xf32> to vector<8xf32>
      %32 = vector.shape_cast %31 : vector<8xf32> to vector<8x1xf32>
      %cst_27 = arith.constant 3.200000e+01 : f32
      %33 = vector.broadcast %cst_27 : f32 to vector<8x1xf32>
      %34 = arith.divf %32, %33 : vector<8x1xf32>
      %cst_28 = arith.constant 9.99999974E-6 : f32
      %35 = vector.broadcast %cst_28 : f32 to vector<8x1xf32>
      %36 = arith.addf %34, %35 : vector<8x1xf32>
      %37 = math.rsqrt %36 : vector<8x1xf32>
      %38 = vector.broadcast %37 : vector<8x1xf32> to vector<8x32xf32>
      %39 = arith.mulf %29, %38 : vector<8x32xf32>
      %40 = vector.broadcast %22 : vector<1x32xf32> to vector<8x32xf32>
      %41 = arith.mulf %39, %40 : vector<8x32xf32>
      %42 = vector.broadcast %23 : vector<1x32xf32> to vector<8x32xf32>
      %43 = arith.addf %41, %42 : vector<8x32xf32>
      %c0_29 = arith.constant 0 : index
      %c0_30 = arith.constant 0 : index
      %44 = vector.load %arg13[%c0_29, %c0_30] : memref<8x32xf32, #tpu.memory_space<vmem>>, vector<8x32xf32>
      tpu.vector_store %arg13[%c0_29, %c0_30], %43 {strides = array<i32>} : memref<8x32xf32, #tpu.memory_space<vmem>>, vector<8x32xf32>,
      %cst_31 = arith.constant 0.000000e+00 : f32
      %45 = vector.broadcast %cst_31 : f32 to vector<8x32xf32>
      %c0_32 = arith.constant 0 : index
      %c0_33 = arith.constant 0 : index
      %46 = vector.load %arg14[%c0_32, %c0_33] : memref<8x32xf32, #tpu.memory_space<vmem>>, vector<8x32xf32>
      tpu.vector_store %arg14[%c0_32, %c0_33], %45 {strides = array<i32>} : memref<8x32xf32, #tpu.memory_space<vmem>>, vector<8x32xf32>,
    } else {
    }
    %c0 = arith.constant 0 : index
    %c0_1 = arith.constant 0 : index
    %3 = vector.load %arg13[%c0, %c0_1] : memref<8x32xf32, #tpu.memory_space<vmem>>, vector<8x32xf32>
    %c0_2 = arith.constant 0 : index
    %c0_3 = arith.constant 0 : index
    %4 = vector.load %arg4[%c0_2, %c0_3] : memref<32x64xf32, #tpu.memory_space<vmem>>, vector<32x64xf32>
    %cst = arith.constant dense<0.000000e+00> : vector<8x64xf32>
    %5 = tpu.matmul %3, %4, %cst {dimension_numbers = #tpu.dot_dimension_numbers<[1], [0], [0], [1], [0, 0, 1, 1], [], []>, precision = #tpu.contract_precision<fp32>} : vector<8x32xf32>, vector<32x64xf32>, vector<8x64xf32> -> vector<8x64xf32>
    %c0_4 = arith.constant 0 : index
    %c0_5 = arith.constant 0 : index
    %6 = vector.load %arg5[%c0_4, %c0_5] : memref<1x64xf32, #tpu.memory_space<vmem>>, vector<1x64xf32>
    %7 = vector.broadcast %6 : vector<1x64xf32> to vector<8x64xf32>
    %8 = arith.addf %5, %7 : vector<8x64xf32>
    %cst_6 = arith.constant 0.000000e+00 : f32
    %9 = vector.broadcast %cst_6 : f32 to vector<8x64xf32>
    %10 = arith.maximumf %8, %9 : vector<8x64xf32>
    %c0_7 = arith.constant 0 : index
    %c0_8 = arith.constant 0 : index
    %11 = vector.load %arg14[%c0_7, %c0_8] : memref<8x32xf32, #tpu.memory_space<vmem>>, vector<8x32xf32>
    %c0_9 = arith.constant 0 : index
    %c0_10 = arith.constant 0 : index
    %12 = vector.load %arg6[%c0_9, %c0_10] : memref<64x32xf32, #tpu.memory_space<vmem>>, vector<64x32xf32>
    %cst_11 = arith.constant dense<0.000000e+00> : vector<8x32xf32>
    %13 = tpu.matmul %10, %12, %cst_11 {dimension_numbers = #tpu.dot_dimension_numbers<[1], [0], [0], [1], [0, 0, 1, 1], [], []>, precision = #tpu.contract_precision<fp32>} : vector<8x64xf32>, vector<64x32xf32>, vector<8x32xf32> -> vector<8x32xf32>
    %14 = arith.addf %11, %13 : vector<8x32xf32>
    %c0_12 = arith.constant 0 : index
    %c0_13 = arith.constant 0 : index
    %15 = vector.load %arg14[%c0_12, %c0_13] : memref<8x32xf32, #tpu.memory_space<vmem>>, vector<8x32xf32>
    tpu.vector_store %arg14[%c0_12, %c0_13], %14 {strides = array<i32>} : memref<8x32xf32, #tpu.memory_space<vmem>>, vector<8x32xf32>,
    %c0_i32_14 = arith.constant 0 : i32
    %16 = arith.cmpi eq, %arg1, %c0_i32_14 : i32
    %17 = arith.extui %16 : i1 to i32
    %c0_i32_15 = arith.constant 0 : i32
    %18 = arith.cmpi ne, %17, %c0_i32_15 : i32
    scf.if %18 {
      %c0_16 = arith.constant 0 : index
      %c0_17 = arith.constant 0 : index
      %19 = vector.load %arg14[%c0_16, %c0_17] : memref<8x32xf32, #tpu.memory_space<vmem>>, vector<8x32xf32>
      %c0_18 = arith.constant 0 : index
      %c0_19 = arith.constant 0 : index
      %20 = vector.load %arg7[%c0_18, %c0_19] : memref<1x32xf32, #tpu.memory_space<vmem>>, vector<1x32xf32>
      %21 = vector.broadcast %20 : vector<1x32xf32> to vector<8x32xf32>
      %22 = arith.addf %19, %21 : vector<8x32xf32>
      %c0_20 = arith.constant 0 : index
      %c0_21 = arith.constant 0 : index
      %23 = vector.load %arg13[%c0_20, %c0_21] : memref<8x32xf32, #tpu.memory_space<vmem>>, vector<8x32xf32>
      %24 = arith.addf %23, %22 : vector<8x32xf32>
      %c0_22 = arith.constant 0 : index
      %c0_23 = arith.constant 0 : index
      %25 = vector.load %arg10[%c0_22, %c0_23] : memref<1x32xf32, #tpu.memory_space<vmem>>, vector<1x32xf32>
      %c0_24 = arith.constant 0 : index
      %c0_25 = arith.constant 0 : index
      %26 = vector.load %arg11[%c0_24, %c0_25] : memref<1x32xf32, #tpu.memory_space<vmem>>, vector<1x32xf32>
      %cst_26 = arith.constant dense<0.000000e+00> : vector<8xf32>
      %27 = vector.multi_reduction <add>, %24, %cst_26 [1] : vector<8x32xf32> to vector<8xf32>
      %28 = vector.shape_cast %27 : vector<8xf32> to vector<8x1xf32>
      %cst_27 = arith.constant 3.200000e+01 : f32
      %29 = vector.broadcast %cst_27 : f32 to vector<8x1xf32>
      %30 = arith.divf %28, %29 : vector<8x1xf32>
      %31 = vector.broadcast %30 : vector<8x1xf32> to vector<8x32xf32>
      %32 = arith.subf %24, %31 : vector<8x32xf32>
      %33 = arith.mulf %32, %32 : vector<8x32xf32>
      %cst_28 = arith.constant dense<0.000000e+00> : vector<8xf32>
      %34 = vector.multi_reduction <add>, %33, %cst_28 [1] : vector<8x32xf32> to vector<8xf32>
      %35 = vector.shape_cast %34 : vector<8xf32> to vector<8x1xf32>
      %cst_29 = arith.constant 3.200000e+01 : f32
      %36 = vector.broadcast %cst_29 : f32 to vector<8x1xf32>
      %37 = arith.divf %35, %36 : vector<8x1xf32>
      %cst_30 = arith.constant 9.99999974E-6 : f32
      %38 = vector.broadcast %cst_30 : f32 to vector<8x1xf32>
      %39 = arith.addf %37, %38 : vector<8x1xf32>
      %40 = math.rsqrt %39 : vector<8x1xf32>
      %41 = vector.broadcast %40 : vector<8x1xf32> to vector<8x32xf32>
      %42 = arith.mulf %32, %41 : vector<8x32xf32>
      %43 = vector.broadcast %25 : vector<1x32xf32> to vector<8x32xf32>
      %44 = arith.mulf %42, %43 : vector<8x32xf32>
      %45 = vector.broadcast %26 : vector<1x32xf32> to vector<8x32xf32>
      %46 = arith.addf %44, %45 : vector<8x32xf32>
      %c0_31 = arith.constant 0 : index
      %c0_32 = arith.constant 0 : index
      %47 = vector.load %arg12[%c0_31, %c0_32] : memref<8x32xf32, #tpu.memory_space<vmem>>, vector<8x32xf32>
      tpu.vector_store %arg12[%c0_31, %c0_32], %46 {strides = array<i32>} : memref<8x32xf32, #tpu.memory_space<vmem>>, vector<8x32xf32>,
    } else {
    }
    return
  }
  func.func @transform_0(%arg0: i32, %arg1: i32) -> (i32, i32) {
    %c0_i32 = arith.constant 0 : i32
    %c0_i32_0 = arith.constant 0 : i32
    return %arg0, %c0_i32 : i32, i32
  }
  func.func @transform_1(%arg0: i32, %arg1: i32) -> (i32, i32) {
    %c0_i32 = arith.constant 0 : i32
    %c0_i32_0 = arith.constant 0 : i32
    return %arg0, %c0_i32 : i32, i32
  }
  func.func @transform_2(%arg0: i32, %arg1: i32) -> (i32, i32) {
    %c0_i32 = arith.constant 0 : i32
    %c0_i32_0 = arith.constant 0 : i32
    return %c0_i32, %arg1 : i32, i32
  }
  func.func @transform_3(%arg0: i32, %arg1: i32) -> (i32, i32) {
    %c0_i32 = arith.constant 0 : i32
    %c0_i32_0 = arith.constant 0 : i32
    return %c0_i32, %arg1 : i32, i32
  }
  func.func @transform_4(%arg0: i32, %arg1: i32) -> (i32, i32) {
    %c0_i32 = arith.constant 0 : i32
    %c0_i32_0 = arith.constant 0 : i32
    return %arg1, %c0_i32 : i32, i32
  }
  func.func @transform_5(%arg0: i32, %arg1: i32) -> (i32, i32) {
    %c0_i32 = arith.constant 0 : i32
    %c0_i32_0 = arith.constant 0 : i32
    %c0_i32_1 = arith.constant 0 : i32
    return %c0_i32, %c0_i32_0 : i32, i32
  }
  func.func @transform_6(%arg0: i32, %arg1: i32) -> (i32, i32) {
    %c0_i32 = arith.constant 0 : i32
    %c0_i32_0 = arith.constant 0 : i32
    %c0_i32_1 = arith.constant 0 : i32
    return %c0_i32, %c0_i32_0 : i32, i32
  }
  func.func @transform_7(%arg0: i32, %arg1: i32) -> (i32, i32) {
    %c0_i32 = arith.constant 0 : i32
    %c0_i32_0 = arith.constant 0 : i32
    %c0_i32_1 = arith.constant 0 : i32
    return %c0_i32, %c0_i32_0 : i32, i32
  }
  func.func @transform_8(%arg0: i32, %arg1: i32) -> (i32, i32) {
    %c0_i32 = arith.constant 0 : i32
    %c0_i32_0 = arith.constant 0 : i32
    %c0_i32_1 = arith.constant 0 : i32
    return %c0_i32, %c0_i32_0 : i32, i32
  }
  func.func @transform_9(%arg0: i32, %arg1: i32) -> (i32, i32) {
    %c0_i32 = arith.constant 0 : i32
    %c0_i32_0 = arith.constant 0 : i32
    %c0_i32_1 = arith.constant 0 : i32
    return %c0_i32, %c0_i32_0 : i32, i32
  }
  func.func @transform_10(%arg0: i32, %arg1: i32) -> (i32, i32) {
    %c0_i32 = arith.constant 0 : i32
    %c0_i32_0 = arith.constant 0 : i32
    return %arg0, %c0_i32 : i32, i32
  }
}

</mosaic_0001>

<llo_original>
// kernel: tpu_custom_call.1
$region0: #{tpu_custom_call.1}
  #allocation0 [shape = 'u32[]', space=smem, size = 0x4, offset = 0x4, fixed_abs, tag = 'smem constant byte address 0x4 - core index']
  #allocation1 [shape = 'u32[72,128]{1,0:T(1,128)}', space=vmem, size = 0x9000, scoped, tag = 'internal scratch']
  #allocation2 [shape = 'f32[8,32]{1,0:T(8,128)}', space=vmem, size = 0x1000, scoped, tag = 'scratch operand']
  #allocation3 [shape = 'f32[8,32]{1,0:T(8,128)}', space=vmem, size = 0x1000, scoped, tag = 'scratch operand']
  %s0 = inlined_call_operand.vmem [shape: f32[16,32], index: 0, kind: input, shape index: {}]
  %s1 = inlined_call_operand.vmem [shape: f32[16,32], index: 1, kind: input, shape index: {}]
  %s2 = inlined_call_operand.vmem [shape: f32[32,64], index: 2, kind: input, shape index: {}]
  %s3 = inlined_call_operand.vmem [shape: f32[1,64], index: 3, kind: input, shape index: {}]
  %s4 = inlined_call_operand.vmem [shape: f32[64,32], index: 4, kind: input, shape index: {}]
  %s5 = inlined_call_operand.vmem [shape: f32[1,32], index: 5, kind: input, shape index: {}]
  %s6 = inlined_call_operand.vmem [shape: f32[1,32], index: 6, kind: input, shape index: {}]
  %s7 = inlined_call_operand.vmem [shape: f32[1,32], index: 7, kind: input, shape index: {}]
  %s8 = inlined_call_operand.vmem [shape: f32[1,32], index: 8, kind: input, shape index: {}]
  %s9 = inlined_call_operand.vmem [shape: f32[1,32], index: 9, kind: input, shape index: {}]
  %s10 = inlined_call_operand.hbm [shape: f32[16,32], index: 10, kind: output, shape index: {}]
  %s11 = sld [smem:[#allocation0]]
  $region81: #{tpu_custom_call.1} parent=0
    _
  %s13 = ssub.s32 1, %s11
  %s14 = scalar_select 0, %s13, %s11
  $region1: #{tpu_custom_call.1} parent=0
    #allocation4 [shape = 'u8[8192]{0}', space=vmem, size = 0x2000, scoped, tag = 'output window, operand 0']
    #allocation5 [shape = 's32[2]{0}', space=sflag, size = 0x8, scoped, tag = 'scoped memory for tpu_custom_call.1']
    %15 = vsyncpa [#allocation5], 0
    %s16 = scalar_lea.sflag [#allocation5], 1
    %17 = vsyncpa %s16, 0
    loop: start=0, step=1, limit=4
    $region2: #{tpu_custom_call.1} parent=1 // loop_pre_header
      _
    $region3: #{tpu_custom_call.1} parent=1 // loop_header
      %s19 = sphi 0, %s23
      %p20 = scmp.ge.s32.totalorder %s19, 4
      %s26 = sphi 0, %s38
      %s27 = sphi 0, %s34
      %s28 = sphi 0, %s26
      %s29 = sphi 0, %s27
      %s30 = sphi 0, %s28
      %s31 = sphi 0, %s29
      %s41 = sphi 0, %s43
      %s44 = sphi 0, %s41
      %s45 = sphi 0, %s44
      %s61 = sphi 0, %s45
      %s67 = sphi 0, %s69
      %s70 = sphi 0, %s67
      %s71 = sphi 0, %s70
      %s87 = sphi 0, %s71
      %s93 = sphi 0, %s95
      %s96 = sphi 0, %s93
      %s97 = sphi 0, %s96
      %s113 = sphi 0, %s97
      %s119 = sphi 0, %s121
      %s122 = sphi 0, %s119
      %s123 = sphi 0, %s122
      %s139 = sphi 0, %s123
      %s145 = sphi 0, %s147
      %s148 = sphi 0, %s145
      %s149 = sphi 0, %s148
      %s165 = sphi 0, %s149
      %s169 = sphi 0, %s169
      %s171 = sphi 0, %s169
      %s172 = sphi 0, %s171
      %s186 = sphi 0, %s172
      %s190 = sphi 0, %s190
      %s192 = sphi 0, %s190
      %s193 = sphi 0, %s192
      %s207 = sphi 0, %s193
      %s211 = sphi 0, %s211
      %s213 = sphi 0, %s211
      %s214 = sphi 0, %s213
      %s228 = sphi 0, %s214
      %s232 = sphi 0, %s232
      %s234 = sphi 0, %s232
      %s235 = sphi 0, %s234
      %s249 = sphi 0, %s235
      %s253 = sphi 0, %s253
      %s255 = sphi 0, %s253
      %s256 = sphi 0, %s255
      %s270 = sphi 0, %s256
      %s276 = sphi 0, %s278
      %s279 = sphi 0, %s276
      %s280 = sphi 0, %s279
      %s296 = sphi 0, %s280
    $region4: #{tpu_custom_call.1} parent=1 // loop_header_branch
      %22 = sbr.rel (%p20) target = $region8
    $region5: #{tpu_custom_call.1} parent=1 // loop_body
      %s24 = ssub.s32 %s19, 1
      %s25 = ssub.s32 %s19, 2
      %s32 = sadd.s32 1, %s27
      %p33 = scmp.ge.s32.totalorder %s32, 1
      %s34 = scalar_select %p33, 0, %s32
      %s35 = sadd.s32 1, %s26
      %s36 = scalar_select %p33, %s35, %s26
      %p37 = scmp.ge.s32.totalorder %s36, 2
      %s38 = scalar_select %p37, 0, %s36
      %s39 = ssub.s32 %s26, %s38
      %p40 = scmp.eq.s32.totalorder %s39, 0
      %s42 = sadd.s32 %s41, 1
      %s43 = scalar_select %p40, %s41, %s42
      %p46 = pneg %p40
      %p47 = scmp.eq.s32.totalorder %s19, 1
      %p48 = por %p46, %p47
      %p49 = scmp.ne.s32.totalorder %s41, %s44
      %p50 = scmp.eq.s32.totalorder %s19, 0
      %p51 = por %p49, %p50
      %p52 = scmp.ne.s32.totalorder %s41, %s44
      %p53 = scmp.eq.s32.totalorder %s24, 1
      %p54 = por %p52, %p53
      %p55 = scmp.ne.s32.totalorder %s44, %s45
      %p56 = scmp.eq.s32.totalorder %s24, 0
      %p57 = por %p55, %p56
      %p58 = scmp.ne.s32.totalorder %s44, %s45
      %p59 = scmp.eq.s32.totalorder %s25, 1
      %p60 = por %p58, %p59
      %p62 = scmp.ne.s32.totalorder %s45, %s61
      %p63 = scmp.eq.s32.totalorder %s25, 0
      %p64 = por %p62, %p63
      %s65 = ssub.s32 %s26, %s38
      %p66 = scmp.eq.s32.totalorder %s65, 0
      %s68 = sadd.s32 %s67, 1
      %s69 = scalar_select %p66, %s67, %s68
      %p72 = pneg %p66
      %p73 = scmp.eq.s32.totalorder %s19, 1
      %p74 = por %p72, %p73
      %p75 = scmp.ne.s32.totalorder %s67, %s70
      %p76 = scmp.eq.s32.totalorder %s19, 0
      %p77 = por %p75, %p76
      %p78 = scmp.ne.s32.totalorder %s67, %s70
      %p79 = scmp.eq.s32.totalorder %s24, 1
      %p80 = por %p78, %p79
      %p81 = scmp.ne.s32.totalorder %s70, %s71
      %p82 = scmp.eq.s32.totalorder %s24, 0
      %p83 = por %p81, %p82
      %p84 = scmp.ne.s32.totalorder %s70, %s71
      %p85 = scmp.eq.s32.totalorder %s25, 1
      %p86 = por %p84, %p85
      %p88 = scmp.ne.s32.totalorder %s71, %s87
      %p89 = scmp.eq.s32.totalorder %s25, 0
      %p90 = por %p88, %p89
      %s91 = ssub.s32 %s27, %s34
      %p92 = scmp.eq.s32.totalorder %s91, 0
      %s94 = sadd.s32 %s93, 1
      %s95 = scalar_select %p92, %s93, %s94
      %p98 = pneg %p92
      %p99 = scmp.eq.s32.totalorder %s19, 1
      %p100 = por %p98, %p99
      %p101 = scmp.ne.s32.totalorder %s93, %s96
      %p102 = scmp.eq.s32.totalorder %s19, 0
      %p103 = por %p101, %p102
      %p104 = scmp.ne.s32.totalorder %s93, %s96
      %p105 = scmp.eq.s32.totalorder %s24, 1
      %p106 = por %p104, %p105
      %p107 = scmp.ne.s32.totalorder %s96, %s97
      %p108 = scmp.eq.s32.totalorder %s24, 0
      %p109 = por %p107, %p108
      %p110 = scmp.ne.s32.totalorder %s96, %s97
      %p111 = scmp.eq.s32.totalorder %s25, 1
      %p112 = por %p110, %p111
      %p114 = scmp.ne.s32.totalorder %s97, %s113
      %p115 = scmp.eq.s32.totalorder %s25, 0
      %p116 = por %p114, %p115
      %s117 = ssub.s32 %s27, %s34
      %p118 = scmp.eq.s32.totalorder %s117, 0
      %s120 = sadd.s32 %s119, 1
      %s121 = scalar_select %p118, %s119, %s120
      %p124 = pneg %p118
      %p125 = scmp.eq.s32.totalorder %s19, 1
      %p126 = por %p124, %p125
      %p127 = scmp.ne.s32.totalorder %s119, %s122
      %p128 = scmp.eq.s32.totalorder %s19, 0
      %p129 = por %p127, %p128
      %p130 = scmp.ne.s32.totalorder %s119, %s122
      %p131 = scmp.eq.s32.totalorder %s24, 1
      %p132 = por %p130, %p131
      %p133 = scmp.ne.s32.totalorder %s122, %s123
      %p134 = scmp.eq.s32.totalorder %s24, 0
      %p135 = por %p133, %p134
      %p136 = scmp.ne.s32.totalorder %s122, %s123
      %p137 = scmp.eq.s32.totalorder %s25, 1
      %p138 = por %p136, %p137
      %p140 = scmp.ne.s32.totalorder %s123, %s139
      %p141 = scmp.eq.s32.totalorder %s25, 0
      %p142 = por %p140, %p141
      %s143 = ssub.s32 %s27, %s34
      %p144 = scmp.eq.s32.totalorder %s143, 0
      %s146 = sadd.s32 %s145, 1
      %s147 = scalar_select %p144, %s145, %s146
      %p150 = pneg %p144
      %p151 = scmp.eq.s32.totalorder %s19, 1
      %p152 = por %p150, %p151
      %p153 = scmp.ne.s32.totalorder %s145, %s148
      %p154 = scmp.eq.s32.totalorder %s19, 0
      %p155 = por %p153, %p154
      %p156 = scmp.ne.s32.totalorder %s145, %s148
      %p157 = scmp.eq.s32.totalorder %s24, 1
      %p158 = por %p156, %p157
      %p159 = scmp.ne.s32.totalorder %s148, %s149
      %p160 = scmp.eq.s32.totalorder %s24, 0
      %p161 = por %p159, %p160
      %p162 = scmp.ne.s32.totalorder %s148, %s149
      %p163 = scmp.eq.s32.totalorder %s25, 1
      %p164 = por %p162, %p163
      %p166 = scmp.ne.s32.totalorder %s149, %s165
      %p167 = scmp.eq.s32.totalorder %s25, 0
      %p168 = por %p166, %p167
      %s170 = sadd.s32 %s169, 1
      %p173 = scmp.eq.s32.totalorder %s19, 1
      %p174 = scmp.ne.s32.totalorder %s169, %s171
      %p175 = scmp.eq.s32.totalorder %s19, 0
      %p176 = por %p174, %p175
      %p177 = scmp.ne.s32.totalorder %s169, %s171
      %p178 = scmp.eq.s32.totalorder %s24, 1
      %p179 = por %p177, %p178
      %p180 = scmp.ne.s32.totalorder %s171, %s172
      %p181 = scmp.eq.s32.totalorder %s24, 0
      %p182 = por %p180, %p181
      %p183 = scmp.ne.s32.totalorder %s171, %s172
      %p184 = scmp.eq.s32.totalorder %s25, 1
      %p185 = por %p183, %p184
      %p187 = scmp.ne.s32.totalorder %s172, %s186
      %p188 = scmp.eq.s32.totalorder %s25, 0
      %p189 = por %p187, %p188
      %s191 = sadd.s32 %s190, 1
      %p194 = scmp.eq.s32.totalorder %s19, 1
      %p195 = scmp.ne.s32.totalorder %s190, %s192
      %p196 = scmp.eq.s32.totalorder %s19, 0
      %p197 = por %p195, %p196
      %p198 = scmp.ne.s32.totalorder %s190, %s192
      %p199 = scmp.eq.s32.totalorder %s24, 1
      %p200 = por %p198, %p199
      %p201 = scmp.ne.s32.totalorder %s192, %s193
      %p202 = scmp.eq.s32.totalorder %s24, 0
      %p203 = por %p201, %p202
      %p204 = scmp.ne.s32.totalorder %s192, %s193
      %p205 = scmp.eq.s32.totalorder %s25, 1
      %p206 = por %p204, %p205
      %p208 = scmp.ne.s32.totalorder %s193, %s207
      %p209 = scmp.eq.s32.totalorder %s25, 0
      %p210 = por %p208, %p209
      %s212 = sadd.s32 %s211, 1
      %p215 = scmp.eq.s32.totalorder %s19, 1
      %p216 = scmp.ne.s32.totalorder %s211, %s213
      %p217 = scmp.eq.s32.totalorder %s19, 0
      %p218 = por %p216, %p217
      %p219 = scmp.ne.s32.totalorder %s211, %s213
      %p220 = scmp.eq.s32.totalorder %s24, 1
      %p221 = por %p219, %p220
      %p222 = scmp.ne.s32.totalorder %s213, %s214
      %p223 = scmp.eq.s32.totalorder %s24, 0
      %p224 = por %p222, %p223
      %p225 = scmp.ne.s32.totalorder %s213, %s214
      %p226 = scmp.eq.s32.totalorder %s25, 1
      %p227 = por %p225, %p226
      %p229 = scmp.ne.s32.totalorder %s214, %s228
      %p230 = scmp.eq.s32.totalorder %s25, 0
      %p231 = por %p229, %p230
      %s233 = sadd.s32 %s232, 1
      %p236 = scmp.eq.s32.totalorder %s19, 1
      %p237 = scmp.ne.s32.totalorder %s232, %s234
      %p238 = scmp.eq.s32.totalorder %s19, 0
      %p239 = por %p237, %p238
      %p240 = scmp.ne.s32.totalorder %s232, %s234
      %p241 = scmp.eq.s32.totalorder %s24, 1
      %p242 = por %p240, %p241
      %p243 = scmp.ne.s32.totalorder %s234, %s235
      %p244 = scmp.eq.s32.totalorder %s24, 0
      %p245 = por %p243, %p244
      %p246 = scmp.ne.s32.totalorder %s234, %s235
      %p247 = scmp.eq.s32.totalorder %s25, 1
      %p248 = por %p246, %p247
      %p250 = scmp.ne.s32.totalorder %s235, %s249
      %p251 = scmp.eq.s32.totalorder %s25, 0
      %p252 = por %p250, %p251
      %s254 = sadd.s32 %s253, 1
      %p257 = scmp.eq.s32.totalorder %s19, 1
      %p258 = scmp.ne.s32.totalorder %s253, %s255
      %p259 = scmp.eq.s32.totalorder %s19, 0
      %p260 = por %p258, %p259
      %p261 = scmp.ne.s32.totalorder %s253, %s255
      %p262 = scmp.eq.s32.totalorder %s24, 1
      %p263 = por %p261, %p262
      %p264 = scmp.ne.s32.totalorder %s255, %s256
      %p265 = scmp.eq.s32.totalorder %s24, 0
      %p266 = por %p264, %p265
      %p267 = scmp.ne.s32.totalorder %s255, %s256
      %p268 = scmp.eq.s32.totalorder %s25, 1
      %p269 = por %p267, %p268
      %p271 = scmp.ne.s32.totalorder %s256, %s270
      %p272 = scmp.eq.s32.totalorder %s25, 0
      %p273 = por %p271, %p272
      %s274 = ssub.s32 %s26, %s38
      %p275 = scmp.eq.s32.totalorder %s274, 0
      %s277 = sadd.s32 %s276, 1
      %s278 = scalar_select %p275, %s276, %s277
      %p281 = pneg %p275
      %p282 = scmp.eq.s32.totalorder %s19, 1
      %p283 = por %p281, %p282
      %p284 = scmp.ne.s32.totalorder %s276, %s279
      %p285 = scmp.eq.s32.totalorder %s19, 0
      %p286 = por %p284, %p285
      %p287 = scmp.ne.s32.totalorder %s276, %s279
      %p288 = scmp.eq.s32.totalorder %s24, 1
      %p289 = por %p287, %p288
      %p290 = scmp.ne.s32.totalorder %s279, %s280
      %p291 = scmp.eq.s32.totalorder %s24, 0
      %p292 = por %p290, %p291
      %p293 = scmp.ne.s32.totalorder %s279, %s280
      %p294 = scmp.eq.s32.totalorder %s25, 1
      %p295 = por %p293, %p294
      %p297 = scmp.ne.s32.totalorder %s280, %s296
      %p298 = scmp.eq.s32.totalorder %s25, 0
      %p299 = por %p297, %p298
      %p300 = scmp.le.s32.totalorder 1, %s19
      %p301 = scmp.lt.s32.totalorder %s19, 3
      %p302 = pnand %p300, %p301
      %p303 = pneg %p302
      // Predicated region
      $region9: #{tpu_custom_call.1} parent=5 // pred_check
        _
      $region10: #{tpu_custom_call.1} parent=5 // pred_check_branch
        %305 = sbr.rel (%p302) target = $region12
      $region11: #{tpu_custom_call.1} parent=5 // pred_region
        %s306 = ssub.s32 %s19, 1
        // Predicated region
        $region13: #{tpu_custom_call.1} parent=11 // pred_check
          %p307 = pneg %p109
        $region14: #{tpu_custom_call.1} parent=11 // pred_check_branch
          %309 = sbr.rel (%p307) target = $region16
        $region15: #{tpu_custom_call.1} parent=11 // pred_region
          %p310 = scmp.lt.s32.totalorder %s29, 0
          %s311 = scalar_select %p310, %s29, 0
          %s312 = smul.addr %s311, 8
          %s313 = scalar_lea.vmem %s2, %s312
        $region16: #{tpu_custom_call.1} parent=11 // pred_fallthru
          _
        // Predicated region
        $region17: #{tpu_custom_call.1} parent=11 // pred_check
          %p314 = pneg %p135
        $region18: #{tpu_custom_call.1} parent=11 // pred_check_branch
          %316 = sbr.rel (%p314) target = $region20
        $region19: #{tpu_custom_call.1} parent=11 // pred_region
          %p317 = scmp.lt.s32.totalorder %s29, 0
          %s318 = scalar_select %p317, %s29, 0
          %s319 = scalar_lea.vmem %s3, %s318
        $region20: #{tpu_custom_call.1} parent=11 // pred_fallthru
          _
        // Predicated region
        $region21: #{tpu_custom_call.1} parent=11 // pred_check
          %p320 = pneg %p161
        $region22: #{tpu_custom_call.1} parent=11 // pred_check_branch
          %322 = sbr.rel (%p320) target = $region24
        $region23: #{tpu_custom_call.1} parent=11 // pred_region
          %s323 = smul.u32 8, %s29
          %p324 = scmp.lt.s32.totalorder %s323, 7
          %s325 = scalar_select %p324, %s323, 7
          %s326 = smul.addr %s325, 8
          %s327 = scalar_lea.vmem %s4, %s326
          %s328 = smul.u32 8, %s29
        $region24: #{tpu_custom_call.1} parent=11 // pred_fallthru
          _
        // Predicated region
        $region25: #{tpu_custom_call.1} parent=11 // pred_check
          %p329 = pneg %p182
        $region26: #{tpu_custom_call.1} parent=11 // pred_check_branch
          %331 = sbr.rel (%p329) target = $region28
        $region27: #{tpu_custom_call.1} parent=11 // pred_region
          _
        $region28: #{tpu_custom_call.1} parent=11 // pred_fallthru
          _
        // Predicated region
        $region29: #{tpu_custom_call.1} parent=11 // pred_check
          %p332 = pneg %p203
        $region30: #{tpu_custom_call.1} parent=11 // pred_check_branch
          %334 = sbr.rel (%p332) target = $region32
        $region31: #{tpu_custom_call.1} parent=11 // pred_region
          _
        $region32: #{tpu_custom_call.1} parent=11 // pred_fallthru
          _
        // Predicated region
        $region33: #{tpu_custom_call.1} parent=11 // pred_check
          %p335 = pneg %p224
        $region34: #{tpu_custom_call.1} parent=11 // pred_check_branch
          %337 = sbr.rel (%p335) target = $region36
        $region35: #{tpu_custom_call.1} parent=11 // pred_region
          _
        $region36: #{tpu_custom_call.1} parent=11 // pred_fallthru
          _
        // Predicated region
        $region37: #{tpu_custom_call.1} parent=11 // pred_check
          %p338 = pneg %p245
        $region38: #{tpu_custom_call.1} parent=11 // pred_check_branch
          %340 = sbr.rel (%p338) target = $region40
        $region39: #{tpu_custom_call.1} parent=11 // pred_region
          _
        $region40: #{tpu_custom_call.1} parent=11 // pred_fallthru
          _
        // Predicated region
        $region41: #{tpu_custom_call.1} parent=11 // pred_check
          %p341 = pneg %p266
        $region42: #{tpu_custom_call.1} parent=11 // pred_check_branch
          %343 = sbr.rel (%p341) target = $region44
        $region43: #{tpu_custom_call.1} parent=11 // pred_region
          _
        $region44: #{tpu_custom_call.1} parent=11 // pred_fallthru
          _
      $region12: #{tpu_custom_call.1} parent=5 // pred_fallthru
        _
      %p344 = scmp.lt.s32.totalorder %s19, 2
      // Predicated region
      $region45: #{tpu_custom_call.1} parent=5 // pred_check
        %p345 = pneg %p344
      $region46: #{tpu_custom_call.1} parent=5 // pred_check_branch
        %347 = sbr.rel (%p345) target = $region48
      $region47: #{tpu_custom_call.1} parent=5 // pred_region
        // Predicated region
        $region49: #{tpu_custom_call.1} parent=47 // pred_check
          %p348 = pneg %p51
        $region50: #{tpu_custom_call.1} parent=47 // pred_check_branch
          %350 = sbr.rel (%p348) target = $region52
        $region51: #{tpu_custom_call.1} parent=47 // pred_region
          %p351 = scmp.lt.s32.totalorder %s26, 1
          %s352 = scalar_select %p351, %s26, 1
          %s353 = smul.addr %s352, 8
          %s354 = scalar_lea.vmem %s0, %s353
        $region52: #{tpu_custom_call.1} parent=47 // pred_fallthru
          _
        // Predicated region
        $region53: #{tpu_custom_call.1} parent=47 // pred_check
          %p355 = pneg %p77
        $region54: #{tpu_custom_call.1} parent=47 // pred_check_branch
          %357 = sbr.rel (%p355) target = $region56
        $region55: #{tpu_custom_call.1} parent=47 // pred_region
          %p358 = scmp.lt.s32.totalorder %s26, 1
          %s359 = scalar_select %p358, %s26, 1
          %s360 = smul.addr %s359, 8
          %s361 = scalar_lea.vmem %s1, %s360
        $region56: #{tpu_custom_call.1} parent=47 // pred_fallthru
          _
      $region48: #{tpu_custom_call.1} parent=5 // pred_fallthru
        _
      %p362 = scmp.le.s32.totalorder 1, %s19
      %p363 = scmp.lt.s32.totalorder %s19, 3
      %p364 = pnand %p362, %p363
      %p365 = pneg %p364
      // Predicated region
      $region57: #{tpu_custom_call.1} parent=5 // pred_check
        _
      $region58: #{tpu_custom_call.1} parent=5 // pred_check_branch
        %367 = sbr.rel (%p364) target = $region60
      $region59: #{tpu_custom_call.1} parent=5 // pred_region
        %s368 = ssub.s32 %s19, 1
        %p369 = scmp.lt.s32.totalorder %s28, 1
        %s370 = scalar_select %p369, %s28, 1
        %s371 = smul.addr %s370, 8
        %s372 = scalar_lea.vmem %s0, %s371
        %p373 = pneg %p57
        %p374 = pneg %p54
        %p375 = scmp.lt.s32.totalorder %s28, 1
        %s376 = scalar_select %p375, %s28, 1
        %s377 = smul.addr %s376, 8
        %s378 = scalar_lea.vmem %s1, %s377
        %p379 = pneg %p83
        %p380 = pneg %p80
        %p381 = scmp.lt.s32.totalorder %s29, 0
        %s382 = scalar_select %p381, %s29, 0
        %s383 = smul.addr %s382, 8
        %s384 = scalar_lea.vmem %s2, %s383
        %p385 = pneg %p109
        %p386 = pneg %p106
        %p387 = scmp.lt.s32.totalorder %s29, 0
        %s388 = scalar_select %p387, %s29, 0
        %s389 = scalar_lea.vmem %s3, %s388
        %p390 = pneg %p135
        %p391 = pneg %p132
        %s392 = smul.u32 8, %s29
        %p393 = scmp.lt.s32.totalorder %s392, 7
        %s394 = scalar_select %p393, %s392, 7
        %s395 = smul.addr %s394, 8
        %s396 = scalar_lea.vmem %s4, %s395
        %p397 = pneg %p161
        %p398 = pneg %p158
        %p399 = pneg %p182
        %p400 = pneg %p179
        %p401 = pneg %p203
        %p402 = pneg %p200
        %p403 = pneg %p224
        %p404 = pneg %p221
        %p405 = pneg %p245
        %p406 = pneg %p242
        %p407 = pneg %p266
        %p408 = pneg %p263
        %p409 = pneg %p292
        %p410 = pneg %p289
        %s411 = sand.u32 %s279, 1
        %s412 = scalar_lea.sflag [#allocation5], %s411
        %s413 = sand.u32 %s279, 1
        %s414 = smul.addr %s413, 8
        %s415 = scalar_lea.vmem [#allocation4], %s414
        %p416 = scmp.lt.s32.totalorder %s28, 1
        %s417 = scalar_select %p416, %s28, 1
        %s418 = smul.addr %s417, 8
        %s419 = scalar_lea.vmem %s0, %s418
        %p420 = scmp.lt.s32.totalorder %s28, 1
        %s421 = scalar_select %p420, %s28, 1
        %s422 = smul.addr %s421, 8
        %s423 = scalar_lea.vmem %s1, %s422
        %p424 = scmp.lt.s32.totalorder %s29, 0
        %s425 = scalar_select %p424, %s29, 0
        %s426 = smul.addr %s425, 8
        %s427 = scalar_lea.vmem %s2, %s426
        %p428 = scmp.lt.s32.totalorder %s29, 0
        %s429 = scalar_select %p428, %s29, 0
        %s430 = scalar_lea.vmem %s3, %s429
        %s431 = smul.u32 8, %s29
        %p432 = scmp.lt.s32.totalorder %s431, 7
        %s433 = scalar_select %p432, %s431, 7
        %s434 = smul.addr %s433, 8
        %s435 = scalar_lea.vmem %s4, %s434
        %s436 = smul.u32 8, %s29
        %p437 = scmp.eq.s32.totalorder %s29, 0
        // Predicated region
        $region61: #{tpu_custom_call.1} parent=59 // pred_check
          %p438 = pneg %p437
        $region62: #{tpu_custom_call.1} parent=59 // pred_check_branch
          %440 = sbr.rel (%p438) target = $region64
        $region63: #{tpu_custom_call.1} parent=59 // pred_region
          %v441 = vld [vmem:[%s419] sm:$0xff]
          %v442 = vld [vmem:[%s423] sm:$0xff]
          %v443 = vadd.f32 %v441, %v442
          %v444 = vld [vmem:[%s6] sm:$0x1]
          %v445 = vld [vmem:[%s7] sm:$0x1]
          %vm446 = vcmask 261120
          %v447 = vsel %vm446, %v443, 0.0
          %448 = vadd.xlane.f32.xlu0 %v447
          %v449 = vpop.xlane.xlu0 %448
          %v450 = vrcp.pop 32.0
          %v451 = vmul.f32 32.0, %v450
          %v452 = vsub.f32 1.0, %v451
          %v453 = vmul.f32 %v450, %v452
          %v454 = vadd.f32 %v450, %v453
          %vm455 = vweird.f32 %v450
          %v456 = vsel %vm455, %v450, %v454
          %v457 = vmul.f32 %v449, %v456
          %v458 = vsub.f32 %v443, %v457
          %v459 = vmul.f32 %v458, %v458
          %v460 = vsel %vm446, %v459, 0.0
          %461 = vadd.xlane.f32.xlu0 %v460
          %v462 = vpop.xlane.xlu0 %461
          %v463 = vmul.f32 %v462, %v456
          %v464 = vadd.f32 %v463, 1e-05
          %v465 = vrsqrt.pop %v464
          %v466 = vmul.f32 %v465, %v464
          %v467 = vmul.f32 %v466, %v465
          %v468 = vmul.f32 0.5, %v467
          %v469 = vsub.f32 1.5, %v468
          %v470 = vmul.f32 %v465, %v469
          %vm471 = vweird.f32 %v464
          %vm472 = vweird.f32 %v465
          %vm473 = vmor %vm471, %vm472
          %v474 = vsel %vm473, %v465, %v470
          %v475 = vmul.f32 %v458, %v474
          %v477 = vperm.slane %v444, 0
          %v479 = vmul.f32 %v475, %v477
          %v481 = vperm.slane %v445, 0
          %v483 = vadd.f32 %v479, %v481
          %484 = vst.msk [vmem:[#allocation2] sm:$0xff] %vm446, %v483
          %485 = vst.msk [vmem:[#allocation3] sm:$0xff] %vm446, 0.0
        $region64: #{tpu_custom_call.1} parent=59 // pred_fallthru
          _
        %v486 = vld [vmem:[#allocation2] sm:$0xff]
        %v487 = vld [vmem:[%s427] sm:$0xff]
        %v488 = vld [vmem:[%s427 + $0x8] sm:$0xff]
        %v489 = vld [vmem:[%s427 + $0x10] sm:$0xff]
        %v490 = vld [vmem:[%s427 + $0x18] sm:$0xff]
        %v491 = vld [vmem:[%s430] sm:$0x1]
        %v493 = vperm.slane %v491, 0
        %vm495 = vcmask 261120
        %v497 = vsel %vm495, %v486, 0
        %499 = vmatpush.msra.mxu0 0.0
        %500 = vmatpush.msra.mxu0 0.0
        %501 = vmatpush.msra.mxu0 0.0
        %502 = vmatpush.msra.mxu0 0.0
        %503 = vmatpush.msra.mxu0 0.0
        %504 = vmatpush.msra.mxu0 0.0
        %505 = vmatpush.msra.mxu0 0.0
        %506 = vmatpush.msra.mxu0 0.0
        %507 = vmatpush.msra.mxu0 0.0
        %508 = vmatpush.msra.mxu0 0.0
        %509 = vmatpush.msra.mxu0 0.0
        %510 = vmatpush.msra.mxu0 0.0
        %v511 = vand.u32 %v490, 4294901760
        %512 = vmatpush.msra.mxu0 %v511
        %v513 = vand.u32 %v489, 4294901760
        %514 = vmatpush.msra.mxu0 %v513
        %v515 = vand.u32 %v488, 4294901760
        %516 = vmatpush.msra.mxu0 %v515
        %v517 = vand.u32 %v487, 4294901760
        %518 = vmatpush.msra.mxu0 %v517
        %v519 = vand.u32 %v497, 4294901760
        %v520 = vsub.f32 %v497, %v519
        %v521 = vand.u32 %v520, 4294901760
        %v522 = vsub.f32 %v520, %v521
        %v523 = vand.u32 %v522, 4294901760
        %524 = vmatmul.f32.gmra.mxu0 %v523
        %v525 = vpop.f32.mrf.mxu0
        %v526 = vadd.f32 %v493, %v525
        %527 = vdwg.mxu0
        %528 = vmatpush.msra.mxu0 0.0
        %529 = vmatpush.msra.mxu0 0.0
        %530 = vmatpush.msra.mxu0 0.0
        %531 = vmatpush.msra.mxu0 0.0
        %532 = vmatpush.msra.mxu0 0.0
        %533 = vmatpush.msra.mxu0 0.0
        %534 = vmatpush.msra.mxu0 0.0
        %535 = vmatpush.msra.mxu0 0.0
        %536 = vmatpush.msra.mxu0 0.0
        %537 = vmatpush.msra.mxu0 0.0
        %538 = vmatpush.msra.mxu0 0.0
        %539 = vmatpush.msra.mxu0 0.0
        %v540 = vand.u32 %v490, 4294901760
        %v541 = vsub.f32 %v490, %v540
        %v542 = vand.u32 %v541, 4294901760
        %v543 = vsub.f32 %v541, %v542
        %v544 = vand.u32 %v543, 4294901760
        %545 = vmatpush.msra.mxu0 %v544
        %v546 = vand.u32 %v489, 4294901760
        %v547 = vsub.f32 %v489, %v546
        %v548 = vand.u32 %v547, 4294901760
        %v549 = vsub.f32 %v547, %v548
        %v550 = vand.u32 %v549, 4294901760
        %551 = vmatpush.msra.mxu0 %v550
        %v552 = vand.u32 %v488, 4294901760
        %v553 = vsub.f32 %v488, %v552
        %v554 = vand.u32 %v553, 4294901760
        %v555 = vsub.f32 %v553, %v554
        %v556 = vand.u32 %v555, 4294901760
        %557 = vmatpush.msra.mxu0 %v556
        %v558 = vand.u32 %v487, 4294901760
        %v559 = vsub.f32 %v487, %v558
        %v560 = vand.u32 %v559, 4294901760
        %v561 = vsub.f32 %v559, %v560
        %v562 = vand.u32 %v561, 4294901760
        %563 = vmatpush.msra.mxu0 %v562
        %v564 = vand.u32 %v497, 4294901760
        %565 = vmatmul.f32.gmra.mxu0 %v564
        %v566 = vpop.f32.mrf.mxu0
        %v567 = vadd.f32 %v526, %v566
        %568 = vdwg.mxu0
        %569 = vmatpush.msra.mxu0 0.0
        %570 = vmatpush.msra.mxu0 0.0
        %571 = vmatpush.msra.mxu0 0.0
        %572 = vmatpush.msra.mxu0 0.0
        %573 = vmatpush.msra.mxu0 0.0
        %574 = vmatpush.msra.mxu0 0.0
        %575 = vmatpush.msra.mxu0 0.0
        %576 = vmatpush.msra.mxu0 0.0
        %577 = vmatpush.msra.mxu0 0.0
        %578 = vmatpush.msra.mxu0 0.0
        %579 = vmatpush.msra.mxu0 0.0
        %580 = vmatpush.msra.mxu0 0.0
        %v581 = vand.u32 %v490, 4294901760
        %v582 = vsub.f32 %v490, %v581
        %583 = vmatpush.msra.mxu0 %v582
        %v584 = vand.u32 %v489, 4294901760
        %v585 = vsub.f32 %v489, %v584
        %586 = vmatpush.msra.mxu0 %v585
        %v587 = vand.u32 %v488, 4294901760
        %v588 = vsub.f32 %v488, %v587
        %589 = vmatpush.msra.mxu0 %v588
        %v590 = vand.u32 %v487, 4294901760
        %v591 = vsub.f32 %v487, %v590
        %592 = vmatpush.msra.mxu0 %v591
        %v593 = vand.u32 %v497, 4294901760
        %v594 = vsub.f32 %v497, %v593
        %595 = vmatmul.f32.gmra.mxu0 %v594
        %v596 = vpop.f32.mrf.mxu0
        %v597 = vadd.f32 %v567, %v596
        %598 = vdwg.mxu0
        %599 = vmatpush.msra.mxu0 0.0
        %600 = vmatpush.msra.mxu0 0.0
        %601 = vmatpush.msra.mxu0 0.0
        %602 = vmatpush.msra.mxu0 0.0
        %603 = vmatpush.msra.mxu0 0.0
        %604 = vmatpush.msra.mxu0 0.0
        %605 = vmatpush.msra.mxu0 0.0
        %606 = vmatpush.msra.mxu0 0.0
        %607 = vmatpush.msra.mxu0 0.0
        %608 = vmatpush.msra.mxu0 0.0
        %609 = vmatpush.msra.mxu0 0.0
        %610 = vmatpush.msra.mxu0 0.0
        %v611 = vand.u32 %v490, 4294901760
        %612 = vmatpush.msra.mxu0 %v611
        %v613 = vand.u32 %v489, 4294901760
        %614 = vmatpush.msra.mxu0 %v613
        %v615 = vand.u32 %v488, 4294901760
        %616 = vmatpush.msra.mxu0 %v615
        %v617 = vand.u32 %v487, 4294901760
        %618 = vmatpush.msra.mxu0 %v617
        %v619 = vand.u32 %v497, 4294901760
        %v620 = vsub.f32 %v497, %v619
        %v621 = vand.u32 %v620, 4294901760
        %622 = vmatmul.f32.gmra.mxu0 %v621
        %v623 = vpop.f32.mrf.mxu0
        %v624 = vadd.f32 %v597, %v623
        %625 = vdwg.mxu0
        %626 = vmatpush.msra.mxu0 0.0
        %627 = vmatpush.msra.mxu0 0.0
        %628 = vmatpush.msra.mxu0 0.0
        %629 = vmatpush.msra.mxu0 0.0
        %630 = vmatpush.msra.mxu0 0.0
        %631 = vmatpush.msra.mxu0 0.0
        %632 = vmatpush.msra.mxu0 0.0
        %633 = vmatpush.msra.mxu0 0.0
        %634 = vmatpush.msra.mxu0 0.0
        %635 = vmatpush.msra.mxu0 0.0
        %636 = vmatpush.msra.mxu0 0.0
        %637 = vmatpush.msra.mxu0 0.0
        %v638 = vand.u32 %v490, 4294901760
        %v639 = vsub.f32 %v490, %v638
        %v640 = vand.u32 %v639, 4294901760
        %641 = vmatpush.msra.mxu0 %v640
        %v642 = vand.u32 %v489, 4294901760
        %v643 = vsub.f32 %v489, %v642
        %v644 = vand.u32 %v643, 4294901760
        %645 = vmatpush.msra.mxu0 %v644
        %v646 = vand.u32 %v488, 4294901760
        %v647 = vsub.f32 %v488, %v646
        %v648 = vand.u32 %v647, 4294901760
        %649 = vmatpush.msra.mxu0 %v648
        %v650 = vand.u32 %v487, 4294901760
        %v651 = vsub.f32 %v487, %v650
        %v652 = vand.u32 %v651, 4294901760
        %653 = vmatpush.msra.mxu0 %v652
        %v654 = vand.u32 %v497, 4294901760
        %655 = vmatmul.f32.gmra.mxu0 %v654
        %v656 = vpop.f32.mrf.mxu0
        %v657 = vadd.f32 %v624, %v656
        %658 = vdwg.mxu0
        %659 = vmatpush.msra.mxu0 0.0
        %660 = vmatpush.msra.mxu0 0.0
        %661 = vmatpush.msra.mxu0 0.0
        %662 = vmatpush.msra.mxu0 0.0
        %663 = vmatpush.msra.mxu0 0.0
        %664 = vmatpush.msra.mxu0 0.0
        %665 = vmatpush.msra.mxu0 0.0
        %666 = vmatpush.msra.mxu0 0.0
        %667 = vmatpush.msra.mxu0 0.0
        %668 = vmatpush.msra.mxu0 0.0
        %669 = vmatpush.msra.mxu0 0.0
        %670 = vmatpush.msra.mxu0 0.0
        %v671 = vand.u32 %v490, 4294901760
        %672 = vmatpush.msra.mxu0 %v671
        %v673 = vand.u32 %v489, 4294901760
        %674 = vmatpush.msra.mxu0 %v673
        %v675 = vand.u32 %v488, 4294901760
        %676 = vmatpush.msra.mxu0 %v675
        %v677 = vand.u32 %v487, 4294901760
        %678 = vmatpush.msra.mxu0 %v677
        %v679 = vand.u32 %v497, 4294901760
        %680 = vmatmul.f32.gmra.mxu0 %v679
        %v681 = vpop.f32.mrf.mxu0
        %v682 = vadd.f32 %v657, %v681
        %683 = vdwg.mxu0
        %v684 = vmax.f32 %v682, 0.0
        %v685 = vld [vmem:[#allocation3] sm:$0xff]
        %v686 = vld [vmem:[%s435] sm:$0xff]
        %v687 = vld [vmem:[%s435 + $0x8] sm:$0xff]
        %v688 = vld [vmem:[%s435 + $0x10] sm:$0xff]
        %v689 = vld [vmem:[%s435 + $0x18] sm:$0xff]
        %v690 = vld [vmem:[%s435 + $0x20] sm:$0xff]
        %v691 = vld [vmem:[%s435 + $0x28] sm:$0xff]
        %v692 = vld [vmem:[%s435 + $0x30] sm:$0xff]
        %v693 = vld [vmem:[%s435 + $0x38] sm:$0xff]
        %vm694 = vcmask 523264
        %v696 = vsel %vm694, %v684, 0
        %698 = vmatpush.msra.mxu0 0.0
        %699 = vmatpush.msra.mxu0 0.0
        %700 = vmatpush.msra.mxu0 0.0
        %701 = vmatpush.msra.mxu0 0.0
        %702 = vmatpush.msra.mxu0 0.0
        %703 = vmatpush.msra.mxu0 0.0
        %704 = vmatpush.msra.mxu0 0.0
        %705 = vmatpush.msra.mxu0 0.0
        %v706 = vand.u32 %v693, 4294901760
        %707 = vmatpush.msra.mxu0 %v706
        %v708 = vand.u32 %v692, 4294901760
        %709 = vmatpush.msra.mxu0 %v708
        %v710 = vand.u32 %v691, 4294901760
        %711 = vmatpush.msra.mxu0 %v710
        %v712 = vand.u32 %v690, 4294901760
        %713 = vmatpush.msra.mxu0 %v712
        %v714 = vand.u32 %v689, 4294901760
        %715 = vmatpush.msra.mxu0 %v714
        %v716 = vand.u32 %v688, 4294901760
        %717 = vmatpush.msra.mxu0 %v716
        %v718 = vand.u32 %v687, 4294901760
        %719 = vmatpush.msra.mxu0 %v718
        %v720 = vand.u32 %v686, 4294901760
        %721 = vmatpush.msra.mxu0 %v720
        %v722 = vand.u32 %v696, 4294901760
        %v723 = vsub.f32 %v696, %v722
        %v724 = vand.u32 %v723, 4294901760
        %v725 = vsub.f32 %v723, %v724
        %v726 = vand.u32 %v725, 4294901760
        %727 = vmatmul.f32.gmra.mxu0 %v726
        %v728 = vpop.f32.mrf.mxu0
        %v729 = vadd.f32 0.0, %v728
        %730 = vdwg.mxu0
        %731 = vmatpush.msra.mxu0 0.0
        %732 = vmatpush.msra.mxu0 0.0
        %733 = vmatpush.msra.mxu0 0.0
        %734 = vmatpush.msra.mxu0 0.0
        %735 = vmatpush.msra.mxu0 0.0
        %736 = vmatpush.msra.mxu0 0.0
        %737 = vmatpush.msra.mxu0 0.0
        %738 = vmatpush.msra.mxu0 0.0
        %v739 = vand.u32 %v693, 4294901760
        %v740 = vsub.f32 %v693, %v739
        %v741 = vand.u32 %v740, 4294901760
        %v742 = vsub.f32 %v740, %v741
        %v743 = vand.u32 %v742, 4294901760
        %744 = vmatpush.msra.mxu0 %v743
        %v745 = vand.u32 %v692, 4294901760
        %v746 = vsub.f32 %v692, %v745
        %v747 = vand.u32 %v746, 4294901760
        %v748 = vsub.f32 %v746, %v747
        %v749 = vand.u32 %v748, 4294901760
        %750 = vmatpush.msra.mxu0 %v749
        %v751 = vand.u32 %v691, 4294901760
        %v752 = vsub.f32 %v691, %v751
        %v753 = vand.u32 %v752, 4294901760
        %v754 = vsub.f32 %v752, %v753
        %v755 = vand.u32 %v754, 4294901760
        %756 = vmatpush.msra.mxu0 %v755
        %v757 = vand.u32 %v690, 4294901760
        %v758 = vsub.f32 %v690, %v757
        %v759 = vand.u32 %v758, 4294901760
        %v760 = vsub.f32 %v758, %v759
        %v761 = vand.u32 %v760, 4294901760
        %762 = vmatpush.msra.mxu0 %v761
        %v763 = vand.u32 %v689, 4294901760
        %v764 = vsub.f32 %v689, %v763
        %v765 = vand.u32 %v764, 4294901760
        %v766 = vsub.f32 %v764, %v765
        %v767 = vand.u32 %v766, 4294901760
        %768 = vmatpush.msra.mxu0 %v767
        %v769 = vand.u32 %v688, 4294901760
        %v770 = vsub.f32 %v688, %v769
        %v771 = vand.u32 %v770, 4294901760
        %v772 = vsub.f32 %v770, %v771
        %v773 = vand.u32 %v772, 4294901760
        %774 = vmatpush.msra.mxu0 %v773
        %v775 = vand.u32 %v687, 4294901760
        %v776 = vsub.f32 %v687, %v775
        %v777 = vand.u32 %v776, 4294901760
        %v778 = vsub.f32 %v776, %v777
        %v779 = vand.u32 %v778, 4294901760
        %780 = vmatpush.msra.mxu0 %v779
        %v781 = vand.u32 %v686, 4294901760
        %v782 = vsub.f32 %v686, %v781
        %v783 = vand.u32 %v782, 4294901760
        %v784 = vsub.f32 %v782, %v783
        %v785 = vand.u32 %v784, 4294901760
        %786 = vmatpush.msra.mxu0 %v785
        %v787 = vand.u32 %v696, 4294901760
        %788 = vmatmul.f32.gmra.mxu0 %v787
        %v789 = vpop.f32.mrf.mxu0
        %v790 = vadd.f32 %v729, %v789
        %791 = vdwg.mxu0
        %792 = vmatpush.msra.mxu0 0.0
        %793 = vmatpush.msra.mxu0 0.0
        %794 = vmatpush.msra.mxu0 0.0
        %795 = vmatpush.msra.mxu0 0.0
        %796 = vmatpush.msra.mxu0 0.0
        %797 = vmatpush.msra.mxu0 0.0
        %798 = vmatpush.msra.mxu0 0.0
        %799 = vmatpush.msra.mxu0 0.0
        %v800 = vand.u32 %v693, 4294901760
        %v801 = vsub.f32 %v693, %v800
        %802 = vmatpush.msra.mxu0 %v801
        %v803 = vand.u32 %v692, 4294901760
        %v804 = vsub.f32 %v692, %v803
        %805 = vmatpush.msra.mxu0 %v804
        %v806 = vand.u32 %v691, 4294901760
        %v807 = vsub.f32 %v691, %v806
        %808 = vmatpush.msra.mxu0 %v807
        %v809 = vand.u32 %v690, 4294901760
        %v810 = vsub.f32 %v690, %v809
        %811 = vmatpush.msra.mxu0 %v810
        %v812 = vand.u32 %v689, 4294901760
        %v813 = vsub.f32 %v689, %v812
        %814 = vmatpush.msra.mxu0 %v813
        %v815 = vand.u32 %v688, 4294901760
        %v816 = vsub.f32 %v688, %v815
        %817 = vmatpush.msra.mxu0 %v816
        %v818 = vand.u32 %v687, 4294901760
        %v819 = vsub.f32 %v687, %v818
        %820 = vmatpush.msra.mxu0 %v819
        %v821 = vand.u32 %v686, 4294901760
        %v822 = vsub.f32 %v686, %v821
        %823 = vmatpush.msra.mxu0 %v822
        %v824 = vand.u32 %v696, 4294901760
        %v825 = vsub.f32 %v696, %v824
        %826 = vmatmul.f32.gmra.mxu0 %v825
        %v827 = vpop.f32.mrf.mxu0
        %v828 = vadd.f32 %v790, %v827
        %829 = vdwg.mxu0
        %830 = vmatpush.msra.mxu0 0.0
        %831 = vmatpush.msra.mxu0 0.0
        %832 = vmatpush.msra.mxu0 0.0
        %833 = vmatpush.msra.mxu0 0.0
        %834 = vmatpush.msra.mxu0 0.0
        %835 = vmatpush.msra.mxu0 0.0
        %836 = vmatpush.msra.mxu0 0.0
        %837 = vmatpush.msra.mxu0 0.0
        %v838 = vand.u32 %v693, 4294901760
        %839 = vmatpush.msra.mxu0 %v838
        %v840 = vand.u32 %v692, 4294901760
        %841 = vmatpush.msra.mxu0 %v840
        %v842 = vand.u32 %v691, 4294901760
        %843 = vmatpush.msra.mxu0 %v842
        %v844 = vand.u32 %v690, 4294901760
        %845 = vmatpush.msra.mxu0 %v844
        %v846 = vand.u32 %v689, 4294901760
        %847 = vmatpush.msra.mxu0 %v846
        %v848 = vand.u32 %v688, 4294901760
        %849 = vmatpush.msra.mxu0 %v848
        %v850 = vand.u32 %v687, 4294901760
        %851 = vmatpush.msra.mxu0 %v850
        %v852 = vand.u32 %v686, 4294901760
        %853 = vmatpush.msra.mxu0 %v852
        %v854 = vand.u32 %v696, 4294901760
        %v855 = vsub.f32 %v696, %v854
        %v856 = vand.u32 %v855, 4294901760
        %857 = vmatmul.f32.gmra.mxu0 %v856
        %v858 = vpop.f32.mrf.mxu0
        %v859 = vadd.f32 %v828, %v858
        %860 = vdwg.mxu0
        %861 = vmatpush.msra.mxu0 0.0
        %862 = vmatpush.msra.mxu0 0.0
        %863 = vmatpush.msra.mxu0 0.0
        %864 = vmatpush.msra.mxu0 0.0
        %865 = vmatpush.msra.mxu0 0.0
        %866 = vmatpush.msra.mxu0 0.0
        %867 = vmatpush.msra.mxu0 0.0
        %868 = vmatpush.msra.mxu0 0.0
        %v869 = vand.u32 %v693, 4294901760
        %v870 = vsub.f32 %v693, %v869
        %v871 = vand.u32 %v870, 4294901760
        %872 = vmatpush.msra.mxu0 %v871
        %v873 = vand.u32 %v692, 4294901760
        %v874 = vsub.f32 %v692, %v873
        %v875 = vand.u32 %v874, 4294901760
        %876 = vmatpush.msra.mxu0 %v875
        %v877 = vand.u32 %v691, 4294901760
        %v878 = vsub.f32 %v691, %v877
        %v879 = vand.u32 %v878, 4294901760
        %880 = vmatpush.msra.mxu0 %v879
        %v881 = vand.u32 %v690, 4294901760
        %v882 = vsub.f32 %v690, %v881
        %v883 = vand.u32 %v882, 4294901760
        %884 = vmatpush.msra.mxu0 %v883
        %v885 = vand.u32 %v689, 4294901760
        %v886 = vsub.f32 %v689, %v885
        %v887 = vand.u32 %v886, 4294901760
        %888 = vmatpush.msra.mxu0 %v887
        %v889 = vand.u32 %v688, 4294901760
        %v890 = vsub.f32 %v688, %v889
        %v891 = vand.u32 %v890, 4294901760
        %892 = vmatpush.msra.mxu0 %v891
        %v893 = vand.u32 %v687, 4294901760
        %v894 = vsub.f32 %v687, %v893
        %v895 = vand.u32 %v894, 4294901760
        %896 = vmatpush.msra.mxu0 %v895
        %v897 = vand.u32 %v686, 4294901760
        %v898 = vsub.f32 %v686, %v897
        %v899 = vand.u32 %v898, 4294901760
        %900 = vmatpush.msra.mxu0 %v899
        %v901 = vand.u32 %v696, 4294901760
        %902 = vmatmul.f32.gmra.mxu0 %v901
        %v903 = vpop.f32.mrf.mxu0
        %v904 = vadd.f32 %v859, %v903
        %905 = vdwg.mxu0
        %906 = vmatpush.msra.mxu0 0.0
        %907 = vmatpush.msra.mxu0 0.0
        %908 = vmatpush.msra.mxu0 0.0
        %909 = vmatpush.msra.mxu0 0.0
        %910 = vmatpush.msra.mxu0 0.0
        %911 = vmatpush.msra.mxu0 0.0
        %912 = vmatpush.msra.mxu0 0.0
        %913 = vmatpush.msra.mxu0 0.0
        %v914 = vand.u32 %v693, 4294901760
        %915 = vmatpush.msra.mxu0 %v914
        %v916 = vand.u32 %v692, 4294901760
        %917 = vmatpush.msra.mxu0 %v916
        %v918 = vand.u32 %v691, 4294901760
        %919 = vmatpush.msra.mxu0 %v918
        %v920 = vand.u32 %v690, 4294901760
        %921 = vmatpush.msra.mxu0 %v920
        %v922 = vand.u32 %v689, 4294901760
        %923 = vmatpush.msra.mxu0 %v922
        %v924 = vand.u32 %v688, 4294901760
        %925 = vmatpush.msra.mxu0 %v924
        %v926 = vand.u32 %v687, 4294901760
        %927 = vmatpush.msra.mxu0 %v926
        %v928 = vand.u32 %v686, 4294901760
        %929 = vmatpush.msra.mxu0 %v928
        %v930 = vand.u32 %v696, 4294901760
        %931 = vmatmul.f32.gmra.mxu0 %v930
        %v932 = vpop.f32.mrf.mxu0
        %v933 = vadd.f32 %v904, %v932
        %934 = vdwg.mxu0
        %v935 = vadd.f32 %v685, %v933
        %936 = vst.msk [vmem:[#allocation3] sm:$0xff] %vm495, %v935
        // Predicated region
        $region65: #{tpu_custom_call.1} parent=59 // pred_check
          %p937 = pneg %p437
        $region66: #{tpu_custom_call.1} parent=59 // pred_check_branch
          %939 = sbr.rel (%p937) target = $region68
        $region67: #{tpu_custom_call.1} parent=59 // pred_region
          %v940 = vld [vmem:[#allocation3] sm:$0xff]
          %v941 = vld [vmem:[%s5] sm:$0x1]
          %v943 = vperm.slane %v941, 0
          %v945 = vadd.f32 %v940, %v943
          %v946 = vld [vmem:[#allocation2] sm:$0xff]
          %v947 = vadd.f32 %v946, %v945
          %v948 = vld [vmem:[%s8] sm:$0x1]
          %v949 = vld [vmem:[%s9] sm:$0x1]
          %v950 = vsel %vm495, %v947, 0.0
          %951 = vadd.xlane.f32.xlu0 %v950
          %v952 = vpop.xlane.xlu0 %951
          %v953 = vrcp.pop 32.0
          %v954 = vmul.f32 32.0, %v953
          %v955 = vsub.f32 1.0, %v954
          %v956 = vmul.f32 %v953, %v955
          %v957 = vadd.f32 %v953, %v956
          %vm958 = vweird.f32 %v953
          %v959 = vsel %vm958, %v953, %v957
          %v960 = vmul.f32 %v952, %v959
          %v961 = vsub.f32 %v947, %v960
          %v962 = vmul.f32 %v961, %v961
          %v963 = vsel %vm495, %v962, 0.0
          %964 = vadd.xlane.f32.xlu0 %v963
          %v965 = vpop.xlane.xlu0 %964
          %v966 = vmul.f32 %v965, %v959
          %v967 = vadd.f32 %v966, 1e-05
          %v968 = vrsqrt.pop %v967
          %v969 = vmul.f32 %v968, %v967
          %v970 = vmul.f32 %v969, %v968
          %v971 = vmul.f32 0.5, %v970
          %v972 = vsub.f32 1.5, %v971
          %v973 = vmul.f32 %v968, %v972
          %vm974 = vweird.f32 %v967
          %vm975 = vweird.f32 %v968
          %vm976 = vmor %vm974, %vm975
          %v977 = vsel %vm976, %v968, %v973
          %v978 = vmul.f32 %v961, %v977
          %v980 = vperm.slane %v948, 0
          %v982 = vmul.f32 %v978, %v980
          %v984 = vperm.slane %v949, 0
          %v986 = vadd.f32 %v982, %v984
          %987 = vst.msk [vmem:[%s415] sm:$0xff] %vm495, %v986
        $region68: #{tpu_custom_call.1} parent=59 // pred_fallthru
          _
        %s988 = sand.u32 %s279, 1
        %s989 = scalar_lea.sflag [#allocation5], %s988
        %s990 = sand.u32 %s279, 1
        %s991 = smul.addr %s990, 8
        %s992 = scalar_lea.vmem [#allocation4], %s991
        // Predicated region
        $region69: #{tpu_custom_call.1} parent=59 // pred_check
          %p993 = pneg %p289
        $region70: #{tpu_custom_call.1} parent=59 // pred_check_branch
          %995 = sbr.rel (%p993) target = $region72
        $region71: #{tpu_custom_call.1} parent=59 // pred_region
          %997 = vsyncadd %s989, 0
          %s998 = smul.addr %s28, 8
          %s999 = scalar_lea.hbm %s10, %s998
          %s1001 = sshll.u32 %s992, 4
          %s1002 = int_to_ptr.vmem [resolvable:$true] %s1001
          %s1003 = sshll.u32 %s999, 4
          %s1004 = int_to_ptr.hbm [resolvable:$true] %s1003
          %1006 = dma.vmem_to_hbm [thread:$0]  %s1002, 128, %s1004, %s989
        $region72: #{tpu_custom_call.1} parent=59 // pred_fallthru
          _
      $region60: #{tpu_custom_call.1} parent=5 // pred_fallthru
        _
      %p1007 = scmp.le.s32.totalorder 2, %s19
      // Predicated region
      $region73: #{tpu_custom_call.1} parent=5 // pred_check
        %p1008 = pneg %p1007
      $region74: #{tpu_custom_call.1} parent=5 // pred_check_branch
        %1010 = sbr.rel (%p1008) target = $region76
      $region75: #{tpu_custom_call.1} parent=5 // pred_region
        %s1011 = ssub.s32 %s19, 2
        // Predicated region
        $region77: #{tpu_custom_call.1} parent=75 // pred_check
          %p1012 = pneg %p295
        $region78: #{tpu_custom_call.1} parent=75 // pred_check_branch
          %1014 = sbr.rel (%p1012) target = $region80
        $region79: #{tpu_custom_call.1} parent=75 // pred_region
          %s1015 = sand.u32 %s280, 1
          %s1016 = scalar_lea.sflag [#allocation5], %s1015
          %s1017 = sand.u32 %s280, 1
          %s1018 = smul.addr %s1017, 8
          %s1019 = scalar_lea.vmem [#allocation4], %s1018
          %1021 = dma.done %s1016, 128
        $region80: #{tpu_custom_call.1} parent=75 // pred_fallthru
          _
      $region76: #{tpu_custom_call.1} parent=5 // pred_fallthru
        _
    $region6: #{tpu_custom_call.1} parent=1 // loop_footer
      %s23 = sadd.s32 1, %s19
    $region7: #{tpu_custom_call.1} parent=1 // loop_footer_branch
      %18 = sbr.rel target = $region3
    $region8: #{tpu_custom_call.1} parent=1 // loop_exit
      _
    %1022 = vsyncpa [#allocation5], 1
    %s1023 = scalar_lea.sflag [#allocation5], 1
    %1024 = vsyncpa %s1023, 1

</llo_original>
